<compile_context>
chip_gen: v6e
topology: v6e:2x2x1
jax: 0.10.0
libtpu: 0.0.40
codegen_flags: <defaults>
</compile_context>

<pallas_src>
import functools

import jax
import jax.numpy as jnp
from jax.experimental import pallas as pl
from jax.experimental.pallas import tpu as pltpu


def _round_up(x, m):
    return ((x + m - 1) // m) * m


def _vmem_capacity_bytes():
    """Physical VMEM of the local chip; conservative fallback if unavailable."""
    try:
        cap = getattr(pltpu.get_tpu_info(), "vmem_capacity_bytes", None)
        if cap:
            return int(cap)
    except Exception:
        pass
    return 128 << 20  # v5e / v6e physical VMEM


def _film_kernel(vis_ref, instr_ref, w1_ref, b1_ref, w2_ref, b2_ref, out_ref):
    # Linear 1 + ReLU (MXU matmul, f32 accumulation).
    h = jnp.dot(instr_ref[...], w1_ref[...],
                preferred_element_type=jnp.float32) + b1_ref[...]
    h = jnp.maximum(h, 0.0)

    # Linear 2 as a single (tb, 2*vision_dim) matmul: fills the 256-wide
    # v6e/v7x MXU in one pass.  The scale/shift lane slices below sit exactly
    # at a 128-lane boundary (vision_dim % 128 == 0), so they are copy-free.
    cond = jnp.dot(h, w2_ref[...],
                   preferred_element_type=jnp.float32) + b2_ref[...]
    vd = vis_ref.shape[1]
    scale = cond[:, :vd]
    shift = cond[:, vd:]

    # FiLM modulation in f32 (VPU), single cast at the store.
    vis = vis_ref[...].astype(jnp.float32)
    out_ref[...] = (vis * scale + shift).astype(out_ref.dtype)


def film_block(vision_embeddings, instruction_vector, w1, b1, w2, b2,
               *, block_rows=None):
    """FiLM forward.

    vision_embeddings: (B, vision_dim)
    instruction_vector: (B, instruct_dim)
    w1: (instruct_dim, vision_dim), b1: (1, vision_dim)       (pre-transposed)
    w2: (vision_dim, 2*vision_dim), b2: (1, 2*vision_dim)     (pre-transposed)
    """
    B, vision_dim = vision_embeddings.shape
    _, instruct_dim = instruction_vector.shape
    assert w1.shape == (instruct_dim, vision_dim)
    assert w2.shape == (vision_dim, 2 * vision_dim)

    # TODO(synk): if a production config uses vision_dim not a multiple of 128,
    # pad the feature dim (or split w2 into scale/shift halves) so the
    # in-kernel slice stays copy-free and output stores stay lane-dense.

    vmem_cap = _vmem_capacity_bytes()
    if block_rows is None:
        # Generation-aware tile: large enough to amortize the ~0.35 us
        # per-grid-step overhead, small enough to double-buffer in VMEM.
        block_rows = 2048 if vmem_cap <= (64 << 20) else 4096

    # Batch tile selection (no wrapper padding; Pallas masks the partial last
    # block on store):
    #   B <= 16               -> single full-extent block.
    #   16 < B <= block_rows  -> split into two tiles so a 2-TC chip (v7x)
    #                            can shard them via dimension_semantics.
    #   B  > block_rows       -> block_rows-sized tiles.
    if B <= 16:
        tb = B
    else:
        tb = min(block_rows, _round_up(pl.cdiv(B, 2), 8))
    grid_b = pl.cdiv(B, tb)

    # VMEM budget: double-buffered streamed tiles + single-buffered resident
    # weights + elementwise temporaries + a few MiB headroom, capped at 75%
    # of physical VMEM.
    itemsize = 4  # f32 math throughout
    streamed = 2 * tb * (2 * vision_dim + instruct_dim) * itemsize     # vis + out + instr, 2 bufs
    resident = (instruct_dim * vision_dim + 2 * vision_dim * vision_dim
                + 3 * vision_dim) * itemsize                           # w1, w2, b1, b2 (1 buf)
    temps = 5 * tb * vision_dim * itemsize                             # h, cond, f32 temps
    vmem_limit = min(streamed + resident + temps + (6 << 20),
                     int(0.75 * vmem_cap))

    full = lambda i: (0, 0)   # constant index_map -> operand stays VMEM-resident
    resident_spec = functools.partial(pl.BlockSpec,
                                      pipeline_mode=pl.Buffered(1))

    return pl.pallas_call(
        _film_kernel,
        out_shape=jax.ShapeDtypeStruct((B, vision_dim), vision_embeddings.dtype),
        grid_spec=pltpu.PrefetchScalarGridSpec(
            num_scalar_prefetch=0,
            grid=(grid_b,),
            in_specs=[
                # Streamed per batch tile (default double-buffered; sweep
                # pl.Buffered(3) here if DMA issue jitter shows up on v7x).
                pl.BlockSpec((tb, vision_dim), lambda i: (i, 0)),      # vis
                pl.BlockSpec((tb, instruct_dim), lambda i: (i, 0)),    # instr
                # VMEM-resident parameters, single-buffered (constant index).
                resident_spec((instruct_dim, vision_dim), full),       # w1
                resident_spec((1, vision_dim), full),                  # b1
                resident_spec((vision_dim, 2 * vision_dim), full),     # w2
                resident_spec((1, 2 * vision_dim), full),              # b2
            ],
            out_specs=pl.BlockSpec((tb, vision_dim), lambda i: (i, 0)),
        ),
        compiler_params=pltpu.CompilerParams(
            dimension_semantics=("parallel",),   # v7x: shard batch tiles over 2 TCs
            vmem_limit_bytes=vmem_limit,
        ),
    )(vision_embeddings, instruction_vector, w1, b1, w2, b2)


def film_reference(vision_embeddings, instruction_vector, w1, b1, w2, b2):
    h = jnp.maximum(instruction_vector @ w1 + b1, 0.0)
    cond = h @ w2 + b2
    c = vision_embeddings.shape[1]
    return vision_embeddings * cond[:, :c] + cond[:, c:]


if __name__ == "__main__":
    vision_dim = 128
    instruct_dim = 64

    key = jax.random.PRNGKey(0)
    k_vis, k_ins, k_w1, k_b1, k_w2, k_b2, k_vis2, k_ins2 = jax.random.split(key, 8)

    # Parameters (nn.Linear shapes, stored pre-transposed (in, out); biases 2D).
    w1 = jax.random.normal(k_w1, (instruct_dim, vision_dim), dtype=jnp.float32) * 0.05
    b1 = jax.random.normal(k_b1, (1, vision_dim), dtype=jnp.float32) * 0.05
    w2 = jax.random.normal(k_w2, (vision_dim, 2 * vision_dim), dtype=jnp.float32) * 0.05
    b2 = jax.random.normal(k_b2, (1, 2 * vision_dim), dtype=jnp.float32) * 0.05

    # --- Small primary test: B=8 -> one full-extent block, grid of 1 ---
    B = 8
    vision = jax.random.normal(k_vis, (B, vision_dim), dtype=jnp.float32)
    instruction = jax.random.normal(k_ins, (B, instruct_dim), dtype=jnp.float32)

    out = film_block(vision, instruction, w1, b1, w2, b2)
    jax.block_until_ready(out)
    ref = film_reference(vision, instruction, w1, b1, w2, b2)
    assert out.shape == (B, vision_dim)
    assert jnp.allclose(out, ref, atol=1e-4, rtol=1e-4), "mismatch vs reference (small)"

    # --- Secondary test: B=1030 -> two batch tiles (520 + partial 510 rows),
    #     exercising the no-pad path with a masked partial last block. ---
    B2 = 1030
    vision2 = jax.random.normal(k_vis2, (B2, vision_dim), dtype=jnp.float32)
    instruction2 = jax.random.normal(k_ins2, (B2, instruct_dim), dtype=jnp.float32)

    out2 = film_block(vision2, instruction2, w1, b1, w2, b2)
    jax.block_until_ready(out2)
    ref2 = film_reference(vision2, instruction2, w1, b1, w2, b2)
    assert out2.shape == (B2, vision_dim)
    assert jnp.allclose(out2, ref2, atol=1e-4, rtol=1e-4), "mismatch vs reference (tiled)"

    print("KERNEL_OK")
</pallas_src>

<mosaic_0001>
module attributes {stable_mosaic.version = 11 : i64} {
  func.func @_film_kernel(%arg0: i32, %arg1: memref<8x128xf32, #tpu.memory_space<vmem>>, %arg2: memref<8x64xf32, #tpu.memory_space<vmem>>, %arg3: memref<64x128xf32, #tpu.memory_space<vmem>>, %arg4: memref<1x128xf32, #tpu.memory_space<vmem>>, %arg5: memref<128x256xf32, #tpu.memory_space<vmem>>, %arg6: memref<1x256xf32, #tpu.memory_space<vmem>>, %arg7: memref<8x128xf32, #tpu.memory_space<vmem>>) attributes {dimension_semantics = [#tpu.dimension_semantics<parallel>], iteration_bounds = array<i64: 1>, scalar_prefetch = 0 : i64, scratch_operands = 0 : i64, tpu.core_type = #tpu.core_type<tc>, window_params = [{transform_indices = @transform_0, window_bounds = array<i64: 8, 128>}, {transform_indices = @transform_1, window_bounds = array<i64: 8, 64>}, {pipeline_mode = #tpu.pipeline_mode<synchronous>, transform_indices = @transform_2, window_bounds = array<i64: 64, 128>}, {pipeline_mode = #tpu.pipeline_mode<synchronous>, transform_indices = @transform_3, window_bounds = array<i64: 1, 128>}, {pipeline_mode = #tpu.pipeline_mode<synchronous>, transform_indices = @transform_4, window_bounds = array<i64: 128, 256>}, {pipeline_mode = #tpu.pipeline_mode<synchronous>, transform_indices = @transform_5, window_bounds = array<i64: 1, 256>}, {transform_indices = @transform_6, window_bounds = array<i64: 8, 128>}]} {
    %c0 = arith.constant 0 : index
    %c0_0 = arith.constant 0 : index
    %0 = vector.load %arg2[%c0, %c0_0] : memref<8x64xf32, #tpu.memory_space<vmem>>, vector<8x64xf32>
    %c0_1 = arith.constant 0 : index
    %c0_2 = arith.constant 0 : index
    %1 = vector.load %arg3[%c0_1, %c0_2] : memref<64x128xf32, #tpu.memory_space<vmem>>, vector<64x128xf32>
    %cst = arith.constant dense<0.000000e+00> : vector<8x128xf32>
    %2 = tpu.matmul %0, %1, %cst {dimension_numbers = #tpu.dot_dimension_numbers<[1], [0], [0], [1], [0, 0, 1, 1], [], []>} : vector<8x64xf32>, vector<64x128xf32>, vector<8x128xf32> -> vector<8x128xf32>
    %c0_3 = arith.constant 0 : index
    %c0_4 = arith.constant 0 : index
    %3 = vector.load %arg4[%c0_3, %c0_4] : memref<1x128xf32, #tpu.memory_space<vmem>>, vector<1x128xf32>
    %4 = vector.broadcast %3 : vector<1x128xf32> to vector<8x128xf32>
    %5 = arith.addf %2, %4 : vector<8x128xf32>
    %cst_5 = arith.constant 0.000000e+00 : f32
    %6 = vector.broadcast %cst_5 : f32 to vector<8x128xf32>
    %7 = arith.maximumf %5, %6 : vector<8x128xf32>
    %c0_6 = arith.constant 0 : index
    %c0_7 = arith.constant 0 : index
    %8 = vector.load %arg5[%c0_6, %c0_7] : memref<128x256xf32, #tpu.memory_space<vmem>>, vector<128x256xf32>
    %cst_8 = arith.constant dense<0.000000e+00> : vector<8x256xf32>
    %9 = tpu.matmul %7, %8, %cst_8 {dimension_numbers = #tpu.dot_dimension_numbers<[1], [0], [0], [1], [0, 0, 1, 1], [], []>} : vector<8x128xf32>, vector<128x256xf32>, vector<8x256xf32> -> vector<8x256xf32>
    %c0_9 = arith.constant 0 : index
    %c0_10 = arith.constant 0 : index
    %10 = vector.load %arg6[%c0_9, %c0_10] : memref<1x256xf32, #tpu.memory_space<vmem>>, vector<1x256xf32>
    %11 = vector.broadcast %10 : vector<1x256xf32> to vector<8x256xf32>
    %12 = arith.addf %9, %11 : vector<8x256xf32>
    %13 = vector.extract_strided_slice %12 {offsets = [0, 0], sizes = [8, 128], strides = [1, 1]} : vector<8x256xf32> to vector<8x128xf32>
    %14 = vector.extract_strided_slice %12 {offsets = [0, 128], sizes = [8, 128], strides = [1, 1]} : vector<8x256xf32> to vector<8x128xf32>
    %c0_11 = arith.constant 0 : index
    %c0_12 = arith.constant 0 : index
    %15 = vector.load %arg1[%c0_11, %c0_12] : memref<8x128xf32, #tpu.memory_space<vmem>>, vector<8x128xf32>
    %16 = arith.mulf %15, %13 : vector<8x128xf32>
    %17 = arith.addf %16, %14 : vector<8x128xf32>
    %c0_13 = arith.constant 0 : index
    %c0_14 = arith.constant 0 : index
    %18 = vector.load %arg7[%c0_13, %c0_14] : memref<8x128xf32, #tpu.memory_space<vmem>>, vector<8x128xf32>
    tpu.vector_store %arg7[%c0_13, %c0_14], %17 {strides = array<i32>} : memref<8x128xf32, #tpu.memory_space<vmem>>, vector<8x128xf32>,
    return
  }
  func.func @transform_0(%arg0: i32) -> (i32, i32) {
    %c0_i32 = arith.constant 0 : i32
    %c0_i32_0 = arith.constant 0 : i32
    return %arg0, %c0_i32 : i32, i32
  }
  func.func @transform_1(%arg0: i32) -> (i32, i32) {
    %c0_i32 = arith.constant 0 : i32
    %c0_i32_0 = arith.constant 0 : i32
    return %arg0, %c0_i32 : i32, i32
  }
  func.func @transform_2(%arg0: i32) -> (i32, i32) {
    %c0_i32 = arith.constant 0 : i32
    %c0_i32_0 = arith.constant 0 : i32
    %c0_i32_1 = arith.constant 0 : i32
    return %c0_i32, %c0_i32_0 : i32, i32
  }
  func.func @transform_3(%arg0: i32) -> (i32, i32) {
    %c0_i32 = arith.constant 0 : i32
    %c0_i32_0 = arith.constant 0 : i32
    %c0_i32_1 = arith.constant 0 : i32
    return %c0_i32, %c0_i32_0 : i32, i32
  }
  func.func @transform_4(%arg0: i32) -> (i32, i32) {
    %c0_i32 = arith.constant 0 : i32
    %c0_i32_0 = arith.constant 0 : i32
    %c0_i32_1 = arith.constant 0 : i32
    return %c0_i32, %c0_i32_0 : i32, i32
  }
  func.func @transform_5(%arg0: i32) -> (i32, i32) {
    %c0_i32 = arith.constant 0 : i32
    %c0_i32_0 = arith.constant 0 : i32
    %c0_i32_1 = arith.constant 0 : i32
    return %c0_i32, %c0_i32_0 : i32, i32
  }
  func.func @transform_6(%arg0: i32) -> (i32, i32) {
    %c0_i32 = arith.constant 0 : i32
    %c0_i32_0 = arith.constant 0 : i32
    return %arg0, %c0_i32 : i32, i32
  }
}

</mosaic_0001>

<llo_original>
// kernel: tpu_custom_call.1
$region0: #{tpu_custom_call.1}
  #allocation0 [shape = 'u32[]', space=smem, size = 0x4, offset = 0x4, fixed_abs, tag = 'smem constant byte address 0x4 - core index']
  #allocation1 [shape = 'u32[144,128]{1,0:T(1,128)}', space=vmem, size = 0x12000, scoped, tag = 'internal scratch']
  %s0 = inlined_call_operand.hbm [shape: f32[8,128], index: 0, kind: input, shape index: {}]
  %s1 = inlined_call_operand.hbm [shape: f32[8,64], index: 1, kind: input, shape index: {}]
  %s2 = inlined_call_operand.hbm [shape: f32[64,128], index: 2, kind: input, shape index: {}]
  %s3 = inlined_call_operand.vmem [shape: f32[1,128], index: 3, kind: input, shape index: {}]
  %s4 = inlined_call_operand.hbm [shape: f32[128,256], index: 4, kind: input, shape index: {}]
  %s5 = inlined_call_operand.vmem [shape: f32[1,256], index: 5, kind: input, shape index: {}]
  %s6 = inlined_call_operand.hbm [shape: f32[8,128], index: 6, kind: output, shape index: {}]
  %s7 = sld [smem:[#allocation0]]
  $region50: #{tpu_custom_call.1} parent=0
    _
  %s9 = ssub.s32 1, %s7
  %s10 = scalar_select 0, %s9, %s7
  $region1: #{tpu_custom_call.1} parent=0
    #allocation2 [shape = 'u8[4096]{0}', space=vmem, size = 0x1000, scoped, tag = 'input window, operand 0, single buffered']
    #allocation3 [shape = 's32[1]{0}', space=sflag, size = 0x4, scoped, tag = 'scoped memory for tpu_custom_call.1']
    #allocation4 [shape = 's32[1]{0}', space=sflag, size = 0x4, scoped, tag = 'scoped memory for tpu_custom_call.1']
    #allocation5 [shape = 'u8[4096]{0}', space=vmem, size = 0x1000, scoped, tag = 'input window, operand 1, single buffered']
    #allocation6 [shape = 's32[1]{0}', space=sflag, size = 0x4, scoped, tag = 'scoped memory for tpu_custom_call.1']
    #allocation7 [shape = 'u8[32768]{0}', space=vmem, size = 0x8000, scoped, tag = 'input window, operand 2, single buffered']
    #allocation8 [shape = 'u8[131072]{0}', space=vmem, size = 0x20000, scoped, tag = 'input window, operand 4, single buffered']
    #allocation9 [shape = 's32[1]{0}', space=sflag, size = 0x4, scoped, tag = 'scoped memory for tpu_custom_call.1']
    #allocation10 [shape = 'u8[4096]{0}', space=vmem, size = 0x1000, scoped, tag = 'output window, operand 0, single buffered']
    %11 = vsyncpa [#allocation3], 0
    %12 = vsyncpa [#allocation6], 0
    %13 = vsyncpa [#allocation9], 0
    %14 = vsyncpa [#allocation4], 0
    // Predicated region
    $region2: #{tpu_custom_call.1} parent=1 // pred_check
      _
    $region3: #{tpu_custom_call.1} parent=1 // pred_check_branch
      %16 = sbr.rel (0) target = $region5
    $region4: #{tpu_custom_call.1} parent=1 // pred_region
      %s18 = ssub.s32 128, 128
      %19 = vsyncadd [#allocation3], %s18
      %s21 = sshll.u32 [#allocation2], 4
      %s22 = int_to_ptr.vmem [resolvable:$true] %s21
      %24 = dma.hbm_to_vmem [thread:$0]  %s0, 128, %s22, [#allocation3]
    $region5: #{tpu_custom_call.1} parent=1 // pred_fallthru
      _
    // Predicated region
    $region6: #{tpu_custom_call.1} parent=1 // pred_check
      _
    $region7: #{tpu_custom_call.1} parent=1 // pred_check_branch
      %26 = sbr.rel (0) target = $region9
    $region8: #{tpu_custom_call.1} parent=1 // pred_region
      %s28 = ssub.s32 128, 128
      %29 = vsyncadd [#allocation6], %s28
      %s31 = sshll.u32 [#allocation5], 4
      %s32 = int_to_ptr.vmem [resolvable:$true] %s31
      %34 = dma.hbm_to_vmem [thread:$0]  %s1, 128, %s32, [#allocation6]
    $region9: #{tpu_custom_call.1} parent=1 // pred_fallthru
      _
    // Predicated region
    $region10: #{tpu_custom_call.1} parent=1 // pred_check
      _
    $region11: #{tpu_custom_call.1} parent=1 // pred_check_branch
      %36 = sbr.rel (0) target = $region13
    $region12: #{tpu_custom_call.1} parent=1 // pred_region
      %s38 = ssub.s32 1024, 1024
      %39 = vsyncadd [#allocation6], %s38
      %s40 = sshll.u32 [#allocation7], 4
      %s41 = int_to_ptr.vmem [resolvable:$true] %s40
      %46 = dma.hbm_to_vmem [thread:$0]  %s2, 1024, %s41, [#allocation6], 128, 128, 8
    $region13: #{tpu_custom_call.1} parent=1 // pred_fallthru
      _
    // Predicated region
    $region14: #{tpu_custom_call.1} parent=1 // pred_check
      _
    $region15: #{tpu_custom_call.1} parent=1 // pred_check_branch
      %48 = sbr.rel (0) target = $region17
    $region16: #{tpu_custom_call.1} parent=1 // pred_region
      _
    $region17: #{tpu_custom_call.1} parent=1 // pred_fallthru
      _
    // Predicated region
    $region18: #{tpu_custom_call.1} parent=1 // pred_check
      _
    $region19: #{tpu_custom_call.1} parent=1 // pred_check_branch
      %50 = sbr.rel (0) target = $region21
    $region20: #{tpu_custom_call.1} parent=1 // pred_region
      %s52 = ssub.s32 4096, 4096
      %53 = vsyncadd [#allocation9], %s52
      %s54 = sshll.u32 [#allocation8], 4
      %s55 = int_to_ptr.vmem [resolvable:$true] %s54
      %60 = dma.hbm_to_vmem [thread:$0]  %s4, 4096, %s55, [#allocation9], 256, 256, 16
    $region21: #{tpu_custom_call.1} parent=1 // pred_fallthru
      _
    // Predicated region
    $region22: #{tpu_custom_call.1} parent=1 // pred_check
      _
    $region23: #{tpu_custom_call.1} parent=1 // pred_check_branch
      %62 = sbr.rel (0) target = $region25
    $region24: #{tpu_custom_call.1} parent=1 // pred_region
      _
    $region25: #{tpu_custom_call.1} parent=1 // pred_fallthru
      _
    // Predicated region
    $region26: #{tpu_custom_call.1} parent=1 // pred_check
      _
    $region27: #{tpu_custom_call.1} parent=1 // pred_check_branch
      %64 = sbr.rel (0) target = $region29
    $region28: #{tpu_custom_call.1} parent=1 // pred_region
      %65 = dma.done [#allocation3], 128
    $region29: #{tpu_custom_call.1} parent=1 // pred_fallthru
      _
    // Predicated region
    $region30: #{tpu_custom_call.1} parent=1 // pred_check
      _
    $region31: #{tpu_custom_call.1} parent=1 // pred_check_branch
      %67 = sbr.rel (0) target = $region33
    $region32: #{tpu_custom_call.1} parent=1 // pred_region
      %68 = dma.done [#allocation6], 128
    $region33: #{tpu_custom_call.1} parent=1 // pred_fallthru
      _
    // Predicated region
    $region34: #{tpu_custom_call.1} parent=1 // pred_check
      _
    $region35: #{tpu_custom_call.1} parent=1 // pred_check_branch
      %70 = sbr.rel (0) target = $region37
    $region36: #{tpu_custom_call.1} parent=1 // pred_region
      %71 = dma.done [#allocation6], 1024
    $region37: #{tpu_custom_call.1} parent=1 // pred_fallthru
      _
    // Predicated region
    $region38: #{tpu_custom_call.1} parent=1 // pred_check
      _
    $region39: #{tpu_custom_call.1} parent=1 // pred_check_branch
      %73 = sbr.rel (0) target = $region41
    $region40: #{tpu_custom_call.1} parent=1 // pred_region
      %74 = dma.done [#allocation9], 4096
    $region41: #{tpu_custom_call.1} parent=1 // pred_fallthru
      _
    %v75 = vld [vmem:[#allocation5] sm:$0xff]
    %v76 = vld [vmem:[#allocation7] sm:$0xff]
    %v77 = vld [vmem:[#allocation7 + $0x8] sm:$0xff]
    %v78 = vld [vmem:[#allocation7 + $0x10] sm:$0xff]
    %v79 = vld [vmem:[#allocation7 + $0x18] sm:$0xff]
    %v80 = vld [vmem:[#allocation7 + $0x20] sm:$0xff]
    %v81 = vld [vmem:[#allocation7 + $0x28] sm:$0xff]
    %v82 = vld [vmem:[#allocation7 + $0x30] sm:$0xff]
    %v83 = vld [vmem:[#allocation7 + $0x38] sm:$0xff]
    %v84 = vld [vmem:[%s3] sm:$0x1]
    %v86 = vlaneseq
    %v87 = vshrl.u32 %v86, 7
    %v88 = vsub.s32 0, %v87
    %v89 = vrot.slane %v84, %v88
    %vm91 = vcmask 523264
    %v93 = vsel %vm91, %v75, 0
    %95 = vmatprep.subr.mxu0 0.0
    %96 = vmatpush1.msra.mxu0 0.0
    %97 = vmatprep.subr.mxu0 0.0
    %98 = vmatpush1.msra.mxu0 0.0
    %99 = vmatprep.subr.mxu0 0.0
    %100 = vmatpush1.msra.mxu0 0.0
    %101 = vmatprep.subr.mxu0 0.0
    %102 = vmatpush1.msra.mxu0 0.0
    %103 = vmatprep.subr.mxu0 0.0
    %104 = vmatpush1.msra.mxu0 0.0
    %105 = vmatprep.subr.mxu0 0.0
    %106 = vmatpush1.msra.mxu0 0.0
    %107 = vmatprep.subr.mxu0 0.0
    %108 = vmatpush1.msra.mxu0 0.0
    %109 = vmatprep.subr.mxu0 0.0
    %110 = vmatpush1.msra.mxu0 0.0
    %111 = vmatprep.subr.mxu0 0.0
    %112 = vmatpush1.msra.mxu0 %v83
    %113 = vmatprep.subr.mxu0 0.0
    %114 = vmatpush1.msra.mxu0 %v82
    %115 = vmatprep.subr.mxu0 0.0
    %116 = vmatpush1.msra.mxu0 %v81
    %117 = vmatprep.subr.mxu0 0.0
    %118 = vmatpush1.msra.mxu0 %v80
    %119 = vmatprep.subr.mxu0 0.0
    %120 = vmatpush1.msra.mxu0 %v79
    %121 = vmatprep.subr.mxu0 0.0
    %122 = vmatpush1.msra.mxu0 %v78
    %123 = vmatprep.subr.mxu0 0.0
    %124 = vmatpush1.msra.mxu0 %v77
    %125 = vmatprep.subr.mxu0 0.0
    %126 = vmatpush1.msra.mxu0 %v76
    %127 = vmatprep.subr.mxu0 0.0
    %128 = vmatpush2.msra.mxu0 0.0
    %129 = vmatprep.subr.mxu0 0.0
    %130 = vmatpush2.msra.mxu0 0.0
    %131 = vmatprep.subr.mxu0 0.0
    %132 = vmatpush2.msra.mxu0 0.0
    %133 = vmatprep.subr.mxu0 0.0
    %134 = vmatpush2.msra.mxu0 0.0
    %135 = vmatprep.subr.mxu0 0.0
    %136 = vmatpush2.msra.mxu0 0.0
    %137 = vmatprep.subr.mxu0 0.0
    %138 = vmatpush2.msra.mxu0 0.0
    %139 = vmatprep.subr.mxu0 0.0
    %140 = vmatpush2.msra.mxu0 0.0
    %141 = vmatprep.subr.mxu0 0.0
    %142 = vmatpush2.msra.mxu0 0.0
    %143 = vmatprep.subr.mxu0 0.0
    %144 = vmatpush2.msra.mxu0 0.0
    %145 = vmatprep.subr.mxu0 0.0
    %146 = vmatpush2.msra.mxu0 0.0
    %147 = vmatprep.subr.mxu0 0.0
    %148 = vmatpush2.msra.mxu0 0.0
    %149 = vmatprep.subr.mxu0 0.0
    %150 = vmatpush2.msra.mxu0 0.0
    %151 = vmatprep.subr.mxu0 0.0
    %152 = vmatpush2.msra.mxu0 0.0
    %153 = vmatprep.subr.mxu0 0.0
    %154 = vmatpush2.msra.mxu0 0.0
    %155 = vmatprep.subr.mxu0 0.0
    %156 = vmatpush2.msra.mxu0 0.0
    %157 = vmatprep.subr.mxu0 0.0
    %158 = vmatpush2.msra.mxu0 0.0
    %159 = vmatprep.mubr.f32.mxu0 0.0
    %160 = vmatmul.mubr.f32.gmra.mxu0 %v93
    %v161 = vpop.f32.mrf.mxu0
    %v162 = vadd.f32 %v89, %v161
    %v163 = vpop.f32.mrf.mxu0
    %164 = vdwg.mxu0
    %v165 = vmax.f32 %v162, 0.0
    %v166 = vld [vmem:[#allocation8] sm:$0xff]
    %v167 = vld [vmem:[#allocation8 + $0x8] sm:$0xff]
    %v168 = vld [vmem:[#allocation8 + $0x10] sm:$0xff]
    %v169 = vld [vmem:[#allocation8 + $0x18] sm:$0xff]
    %v170 = vld [vmem:[#allocation8 + $0x20] sm:$0xff]
    %v171 = vld [vmem:[#allocation8 + $0x28] sm:$0xff]
    %v172 = vld [vmem:[#allocation8 + $0x30] sm:$0xff]
    %v173 = vld [vmem:[#allocation8 + $0x38] sm:$0xff]
    %v174 = vld [vmem:[#allocation8 + $0x40] sm:$0xff]
    %v175 = vld [vmem:[#allocation8 + $0x48] sm:$0xff]
    %v176 = vld [vmem:[#allocation8 + $0x50] sm:$0xff]
    %v177 = vld [vmem:[#allocation8 + $0x58] sm:$0xff]
    %v178 = vld [vmem:[#allocation8 + $0x60] sm:$0xff]
    %v179 = vld [vmem:[#allocation8 + $0x68] sm:$0xff]
    %v180 = vld [vmem:[#allocation8 + $0x70] sm:$0xff]
    %v181 = vld [vmem:[#allocation8 + $0x78] sm:$0xff]
    %v182 = vld [vmem:[#allocation8 + $0x80] sm:$0xff]
    %v183 = vld [vmem:[#allocation8 + $0x88] sm:$0xff]
    %v184 = vld [vmem:[#allocation8 + $0x90] sm:$0xff]
    %v185 = vld [vmem:[#allocation8 + $0x98] sm:$0xff]
    %v186 = vld [vmem:[#allocation8 + $0xa0] sm:$0xff]
    %v187 = vld [vmem:[#allocation8 + $0xa8] sm:$0xff]
    %v188 = vld [vmem:[#allocation8 + $0xb0] sm:$0xff]
    %v189 = vld [vmem:[#allocation8 + $0xb8] sm:$0xff]
    %v190 = vld [vmem:[#allocation8 + $0xc0] sm:$0xff]
    %v191 = vld [vmem:[#allocation8 + $0xc8] sm:$0xff]
    %v192 = vld [vmem:[#allocation8 + $0xd0] sm:$0xff]
    %v193 = vld [vmem:[#allocation8 + $0xd8] sm:$0xff]
    %v194 = vld [vmem:[#allocation8 + $0xe0] sm:$0xff]
    %v195 = vld [vmem:[#allocation8 + $0xe8] sm:$0xff]
    %v196 = vld [vmem:[#allocation8 + $0xf0] sm:$0xff]
    %v197 = vld [vmem:[#allocation8 + $0xf8] sm:$0xff]
    %v198 = vld [vmem:[%s5] sm:$0x3]
    %v200 = vlaneseq
    %v201 = vshrl.u32 %v200, 7
    %v202 = vsub.s32 0, %v201
    %v203 = vrot.slane %v198, %v202
    %v204 = vlaneseq
    %v205 = vshrl.u32 %v204, 7
    %v206 = vsub.s32 1, %v205
    %v207 = vrot.slane %v198, %v206
    %210 = vmatprep.subr.mxu0 %v197
    %211 = vmatpush1.msra.mxu0 %v196
    %212 = vmatprep.subr.mxu0 %v195
    %213 = vmatpush1.msra.mxu0 %v194
    %214 = vmatprep.subr.mxu0 %v193
    %215 = vmatpush1.msra.mxu0 %v192
    %216 = vmatprep.subr.mxu0 %v191
    %217 = vmatpush1.msra.mxu0 %v190
    %218 = vmatprep.subr.mxu0 %v189
    %219 = vmatpush1.msra.mxu0 %v188
    %220 = vmatprep.subr.mxu0 %v187
    %221 = vmatpush1.msra.mxu0 %v186
    %222 = vmatprep.subr.mxu0 %v185
    %223 = vmatpush1.msra.mxu0 %v184
    %224 = vmatprep.subr.mxu0 %v183
    %225 = vmatpush1.msra.mxu0 %v182
    %226 = vmatprep.subr.mxu0 %v181
    %227 = vmatpush1.msra.mxu0 %v180
    %228 = vmatprep.subr.mxu0 %v179
    %229 = vmatpush1.msra.mxu0 %v178
    %230 = vmatprep.subr.mxu0 %v177
    %231 = vmatpush1.msra.mxu0 %v176
    %232 = vmatprep.subr.mxu0 %v175
    %233 = vmatpush1.msra.mxu0 %v174
    %234 = vmatprep.subr.mxu0 %v173
    %235 = vmatpush1.msra.mxu0 %v172
    %236 = vmatprep.subr.mxu0 %v171
    %237 = vmatpush1.msra.mxu0 %v170
    %238 = vmatprep.subr.mxu0 %v169
    %239 = vmatpush1.msra.mxu0 %v168
    %240 = vmatprep.subr.mxu0 %v167
    %241 = vmatpush1.msra.mxu0 %v166
    %242 = vmatprep.subr.mxu0 0.0
    %243 = vmatpush2.msra.mxu0 0.0
    %244 = vmatprep.subr.mxu0 0.0
    %245 = vmatpush2.msra.mxu0 0.0
    %246 = vmatprep.subr.mxu0 0.0
    %247 = vmatpush2.msra.mxu0 0.0
    %248 = vmatprep.subr.mxu0 0.0
    %249 = vmatpush2.msra.mxu0 0.0
    %250 = vmatprep.subr.mxu0 0.0
    %251 = vmatpush2.msra.mxu0 0.0
    %252 = vmatprep.subr.mxu0 0.0
    %253 = vmatpush2.msra.mxu0 0.0
    %254 = vmatprep.subr.mxu0 0.0
    %255 = vmatpush2.msra.mxu0 0.0
    %256 = vmatprep.subr.mxu0 0.0
    %257 = vmatpush2.msra.mxu0 0.0
    %258 = vmatprep.subr.mxu0 0.0
    %259 = vmatpush2.msra.mxu0 0.0
    %260 = vmatprep.subr.mxu0 0.0
    %261 = vmatpush2.msra.mxu0 0.0
    %262 = vmatprep.subr.mxu0 0.0
    %263 = vmatpush2.msra.mxu0 0.0
    %264 = vmatprep.subr.mxu0 0.0
    %265 = vmatpush2.msra.mxu0 0.0
    %266 = vmatprep.subr.mxu0 0.0
    %267 = vmatpush2.msra.mxu0 0.0
    %268 = vmatprep.subr.mxu0 0.0
    %269 = vmatpush2.msra.mxu0 0.0
    %270 = vmatprep.subr.mxu0 0.0
    %271 = vmatpush2.msra.mxu0 0.0
    %272 = vmatprep.subr.mxu0 0.0
    %273 = vmatpush2.msra.mxu0 0.0
    %274 = vmatprep.mubr.f32.mxu0 0.0
    %275 = vmatmul.mubr.f32.gmra.mxu0 %v165
    %v276 = vpop.f32.mrf.mxu0
    %v277 = vadd.f32 %v203, %v276
    %v278 = vpop.f32.mrf.mxu0
    %v279 = vadd.f32 %v207, %v278
    %280 = vdwg.mxu0
    %v281 = vld [vmem:[#allocation2] sm:$0xff]
    %v282 = vmul.f32 %v281, %v277
    %v283 = vadd.f32 %v282, %v279
    %284 = vst [vmem:[#allocation10] sm:$0xff] %v283
    // Predicated region
    $region42: #{tpu_custom_call.1} parent=1 // pred_check
      _
    $region43: #{tpu_custom_call.1} parent=1 // pred_check_branch
      %286 = sbr.rel (0) target = $region45
    $region44: #{tpu_custom_call.1} parent=1 // pred_region
      %s288 = ssub.s32 128, 128
      %289 = vsyncadd [#allocation4], %s288
      %s291 = sshll.u32 [#allocation10], 4
      %s292 = int_to_ptr.vmem [resolvable:$true] %s291
      %294 = dma.vmem_to_hbm [thread:$0]  %s292, 128, %s6, [#allocation4]
    $region45: #{tpu_custom_call.1} parent=1 // pred_fallthru
      _
    // Predicated region
    $region46: #{tpu_custom_call.1} parent=1 // pred_check
      _
    $region47: #{tpu_custom_call.1} parent=1 // pred_check_branch
      %296 = sbr.rel (0) target = $region49
    $region48: #{tpu_custom_call.1} parent=1 // pred_region
      %297 = dma.done [#allocation4], 128
    $region49: #{tpu_custom_call.1} parent=1 // pred_fallthru
      _
    %298 = vsyncpa [#allocation3], 1
    %299 = vsyncpa [#allocation6], 1
    %300 = vsyncpa [#allocation9], 1
    %301 = vsyncpa [#allocation4], 1

</llo_original>
